<compile_context>
chip_gen: v6e
topology: v6e:2x2x1
jax: 0.10.0
libtpu: 0.0.40
codegen_flags: <defaults>
</compile_context>

<pallas_src>
import functools

import jax
import jax.numpy as jnp
from jax.experimental import pallas as pl
from jax.experimental.pallas import tpu as pltpu


_PIPELINE_VMEM_BUDGET = 32 * 1024 * 1024   # target bytes for all double-buffered blocks
_DEFAULT_VMEM_LIMIT = 48 * 1024 * 1024     # scoped VMEM limit (safe on v5e/v6e/v7x)


def _round_up(x, m):
    return ((x + m - 1) // m) * m


def _choose_tiles(N, C, HW, itemsize, budget):
    """Pick (TB, THW, vmem_limit) for the (N, C, HW) -> (N, HW) channel reduction."""
    pack = max(8, 32 // itemsize)           # sublane packing: 8 f32, 16 bf16, 32 int8
    tb = min(N, 8)                          # == full N if N <= 8, else divisible by 8
    c_pad = _round_up(C, pack)              # real (sublane-padded) channel extent in VMEM
    # Bytes per lane column: double-buffered x block + double-buffered out block.
    per_lane = 2 * (tb * c_pad + _round_up(tb, pack)) * itemsize
    max_thw = max(128, (budget // per_lane) // 128 * 128)
    # Full spatial extent if it fits one tile (block == full dim is always legal),
    # otherwise a multiple-of-128 tile; pl.cdiv grid handles a ragged tail block.
    thw = HW if HW <= max_thw else max_thw
    vmem_need = per_lane * _round_up(thw, 128)
    vmem_limit = max(_DEFAULT_VMEM_LIMIT, vmem_need + (2 << 20))
    return tb, thw, vmem_limit


def _spatial_attention_kernel(w_ref, b_ref, x_ref, o_ref):
    # w_ref: VMEM (C, 1) f32 (resident; same block every step)
    # b_ref: SMEM (1,) f32
    # x_ref: VMEM (TB, C, THW)
    # o_ref: VMEM (TB, THW)
    x = x_ref[...]
    w = w_ref[...][None, :, :].astype(x.dtype)          # (1, C, 1) — tiny
    prod = (x * w).astype(jnp.float32)                  # one VPU mul / element
    acc = jnp.sum(prod, axis=1) + b_ref[0]              # sublane reduce (XLU) + bias
    o_ref[...] = acc.astype(o_ref.dtype)


@functools.partial(jax.jit, static_argnames=("tile_budget_bytes",))
def spatial_attention(x, weight, bias, *, tile_budget_bytes=_PIPELINE_VMEM_BUDGET):
    """x: (N, C, H, W); weight: (1, C, 1, 1); bias: (1,). Returns (N, 1, H, W)."""
    N, C, H, W = x.shape
    HW = H * W
    itemsize = jnp.dtype(x.dtype).itemsize
    tb, thw, vmem_limit = _choose_tiles(N, C, HW, itemsize, tile_budget_bytes)

    x_flat = x.reshape(N, C, HW)                        # free (contiguous) reshape
    w_col = weight.reshape(C, 1).astype(jnp.float32)
    b_vec = bias.reshape(1).astype(jnp.float32)

    grid = (pl.cdiv(N, tb), pl.cdiv(HW, thw))

    cost = pl.CostEstimate(
        flops=2 * N * C * HW,
        transcendentals=0,
        bytes_accessed=(N * C * HW + N * HW) * itemsize + (C + 1) * 4,
    )

    out = pl.pallas_call(
        _spatial_attention_kernel,
        out_shape=jax.ShapeDtypeStruct((N, HW), x.dtype),
        grid_spec=pltpu.PrefetchScalarGridSpec(
            num_scalar_prefetch=0,
            grid=grid,
            in_specs=[
                pl.BlockSpec((C, 1), lambda nb, j: (0, 0)),              # weight (VMEM)
                pl.BlockSpec(memory_space=pltpu.MemorySpace.SMEM),       # bias
                pl.BlockSpec((tb, C, thw), lambda nb, j: (nb, 0, j)),    # x tile
            ],
            out_specs=pl.BlockSpec((tb, thw), lambda nb, j: (nb, j)),    # sublane-dense out
        ),
        compiler_params=pltpu.CompilerParams(
            dimension_semantics=("parallel", "parallel"),
            vmem_limit_bytes=vmem_limit,
        ),
        cost_estimate=cost,
    )(w_col, b_vec, x_flat)

    return out.reshape(N, 1, H, W)                       # free reshape back to NCHW


def _reference(x, weight, bias):
    C = x.shape[1]
    ref = jnp.einsum("nchw,c->nhw", x.astype(jnp.float32),
                     weight.reshape(C).astype(jnp.float32))
    ref = ref + bias.astype(jnp.float32)[0]
    return ref[:, None, :, :].astype(x.dtype)


if __name__ == "__main__":
    key = jax.random.PRNGKey(0)
    kx, kw, kb, kx2, kw2, kb2, kx3, kw3, kb3 = jax.random.split(key, 9)

    # --- Module's toy config: batch=2, dim=4, 16x16 (single tile, TB=N) ---
    N, C, H, W = 2, 4, 16, 16
    x = jax.random.normal(kx, (N, C, H, W), dtype=jnp.float32)
    weight = jax.random.normal(kw, (1, C, 1, 1), dtype=jnp.float32) * 0.1
    bias = jax.random.normal(kb, (1,), dtype=jnp.float32) * 0.1
    out = jax.block_until_ready(spatial_attention(x, weight, bias))
    assert out.shape == (N, 1, H, W)
    assert jnp.allclose(out, _reference(x, weight, bias), atol=1e-5, rtol=1e-5)

    # --- Larger channel count (same unified multiply + sublane-reduce path) ---
    C2 = 128
    x2 = jax.random.normal(kx2, (N, C2, H, W), dtype=jnp.float32)
    weight2 = jax.random.normal(kw2, (1, C2, 1, 1), dtype=jnp.float32) * 0.05
    bias2 = jax.random.normal(kb2, (1,), dtype=jnp.float32) * 0.1
    out2 = jax.block_until_ready(spatial_attention(x2, weight2, bias2))
    assert out2.shape == (N, 1, H, W)
    assert jnp.allclose(out2, _reference(x2, weight2, bias2), atol=1e-4, rtol=1e-4)

    # --- Batch-blocked (TB=8) + multi-tile lane axis with a ragged tail:
    #     HW = 320, tiny tile budget forces THW = 128 -> 3 lane tiles (last = 64 valid).
    N3, C3, H3, W3 = 16, 4, 16, 20
    x3 = jax.random.normal(kx3, (N3, C3, H3, W3), dtype=jnp.float32)
    weight3 = jax.random.normal(kw3, (1, C3, 1, 1), dtype=jnp.float32) * 0.1
    bias3 = jax.random.normal(kb3, (1,), dtype=jnp.float32) * 0.1
    out3 = jax.block_until_ready(
        spatial_attention(x3, weight3, bias3, tile_budget_bytes=32 * 1024))
    assert out3.shape == (N3, 1, H3, W3)
    assert jnp.allclose(out3, _reference(x3, weight3, bias3), atol=1e-5, rtol=1e-5)

    print("KERNEL_OK")
</pallas_src>

<mosaic_0001>
module attributes {stable_mosaic.version = 11 : i64} {
  func.func @_spatial_attention_kernel(%arg0: i32, %arg1: i32, %arg2: memref<4x1xf32, #tpu.memory_space<vmem>>, %arg3: memref<1xf32, #tpu.memory_space<smem>>, %arg4: memref<2x4x256xf32, #tpu.memory_space<vmem>>, %arg5: memref<2x256xf32, #tpu.memory_space<vmem>>) attributes {dimension_semantics = [#tpu.dimension_semantics<parallel>, #tpu.dimension_semantics<parallel>], iteration_bounds = array<i64: 1, 1>, scalar_prefetch = 0 : i64, scratch_operands = 0 : i64, tpu.core_type = #tpu.core_type<tc>, window_params = [{pipeline_mode = #tpu.pipeline_mode<synchronous>, transform_indices = @transform_0, window_bounds = array<i64: 4, 1>}, {transform_indices = @transform_1, window_bounds = array<i64: 1>}, {transform_indices = @transform_2, window_bounds = array<i64: 2, 4, 256>}, {transform_indices = @transform_3, window_bounds = array<i64: 2, 256>}]} {
    %c0 = arith.constant 0 : index
    %c0_0 = arith.constant 0 : index
    %c0_1 = arith.constant 0 : index
    %0 = vector.load %arg4[%c0, %c0_0, %c0_1] : memref<2x4x256xf32, #tpu.memory_space<vmem>>, vector<2x4x256xf32>
    %c0_2 = arith.constant 0 : index
    %c0_3 = arith.constant 0 : index
    %1 = vector.load %arg2[%c0_2, %c0_3] : memref<4x1xf32, #tpu.memory_space<vmem>>, vector<4x1xf32>
    %2 = vector.shape_cast %1 : vector<4x1xf32> to vector<1x4x1xf32>
    %3 = vector.broadcast %2 : vector<1x4x1xf32> to vector<2x4x256xf32>
    %4 = arith.mulf %0, %3 : vector<2x4x256xf32>
    %cst = arith.constant dense<0.000000e+00> : vector<2x256xf32>
    %5 = vector.multi_reduction <add>, %4, %cst [1] : vector<2x4x256xf32> to vector<2x256xf32>
    %c0_4 = arith.constant 0 : index
    %6 = memref.load %arg3[%c0_4] : memref<1xf32, #tpu.memory_space<smem>>
    %7 = vector.broadcast %6 : f32 to vector<2x256xf32>
    %8 = arith.addf %5, %7 : vector<2x256xf32>
    %c0_5 = arith.constant 0 : index
    %c0_6 = arith.constant 0 : index
    %9 = vector.load %arg5[%c0_5, %c0_6] : memref<2x256xf32, #tpu.memory_space<vmem>>, vector<2x256xf32>
    tpu.vector_store %arg5[%c0_5, %c0_6], %8 {strides = array<i32>} : memref<2x256xf32, #tpu.memory_space<vmem>>, vector<2x256xf32>,
    return
  }
  func.func @transform_0(%arg0: i32, %arg1: i32) -> (i32, i32) {
    %c0_i32 = arith.constant 0 : i32
    %c0_i32_0 = arith.constant 0 : i32
    %c0_i32_1 = arith.constant 0 : i32
    return %c0_i32, %c0_i32_0 : i32, i32
  }
  func.func @transform_1(%arg0: i32, %arg1: i32) -> i32 {
    %c0_i32 = arith.constant 0 : i32
    %c0_i32_0 = arith.constant 0 : i32
    return %c0_i32 : i32
  }
  func.func @transform_2(%arg0: i32, %arg1: i32) -> (i32, i32, i32) {
    %c0_i32 = arith.constant 0 : i32
    %c0_i32_0 = arith.constant 0 : i32
    return %arg0, %c0_i32, %arg1 : i32, i32, i32
  }
  func.func @transform_3(%arg0: i32, %arg1: i32) -> (i32, i32) {
    %c0_i32 = arith.constant 0 : i32
    return %arg0, %arg1 : i32, i32
  }
}

</mosaic_0001>

<llo_original>
// kernel: spatial_attention.1
$region0: #{spatial_attention.1}
  #allocation0 [shape = 'u32[]', space=smem, size = 0x4, offset = 0x4, fixed_abs, tag = 'smem constant byte address 0x4 - core index']
  #allocation1 [shape = 'u32[144,128]{1,0:T(1,128)}', space=vmem, size = 0x12000, scoped, tag = 'internal scratch']
  #allocation2 [shape = 'f32[1]{0:T(128)S(6)}', space=smem, size = 0x200, scoped, tag = 'scoped memory for spatial_attention.1']
  %s0 = inlined_call_operand.vmem [shape: f32[4,1], index: 0, kind: input, shape index: {}]
  %s1 = inlined_call_operand.<no memory space> [shape: f32[1], index: 1, kind: input, shape index: {}]
  %s2 = inlined_call_operand.vmem [shape: f32[2,4,256], index: 2, kind: input, shape index: {}]
  %s3 = inlined_call_operand.vmem [shape: f32[2,256], index: 3, kind: output, shape index: {}]
  %s4 = sld [smem:[#allocation0]]
  $region22: #{spatial_attention.1} parent=0
    _
  %s6 = ssub.s32 1, %s4
  %s7 = scalar_select 0, %s6, %s4
  %8 = sst [smem:[#allocation2]] %s1
  // Predicated region
  $region2: #{spatial_attention.1} parent=0 // pred_check
    _
  $region3: #{spatial_attention.1} parent=0 // pred_check_branch
    %10 = sbr.rel (0) target = $region5
  $region4: #{spatial_attention.1} parent=0 // pred_region
    _
  $region5: #{spatial_attention.1} parent=0 // pred_fallthru
    _
  // Predicated region
  $region6: #{spatial_attention.1} parent=0 // pred_check
    _
  $region7: #{spatial_attention.1} parent=0 // pred_check_branch
    %12 = sbr.rel (0) target = $region9
  $region8: #{spatial_attention.1} parent=0 // pred_region
    _
  $region9: #{spatial_attention.1} parent=0 // pred_fallthru
    _
  // Predicated region
  $region10: #{spatial_attention.1} parent=0 // pred_check
    _
  $region11: #{spatial_attention.1} parent=0 // pred_check_branch
    %14 = sbr.rel (0) target = $region13
  $region12: #{spatial_attention.1} parent=0 // pred_region
    _
  $region13: #{spatial_attention.1} parent=0 // pred_fallthru
    _
  %v15 = vld [vmem:[%s2] sm:$0xff]
  %v16 = vld [vmem:[%s2 + $0x8] sm:$0xff]
  %v17 = vld [vmem:[%s0] sm:$0xf]
  %19 = vset.pattern.permute.xlu0 0
  %20 = vperm.xlu0 %19, %v17
  %v21 = vpop.permute.xlu0 %20
  %v23 = vunpack.c.l.s4 839922192
  %v24 = vunpack.c.0.s8 %v23
  %v25 = vlaneseq
  %v26 = vshrl.u32 %v25, 7
  %v27 = vsub.s32 %v24, %v26
  %v28 = vrot.slane %v21, %v27
  %v30 = vmul.f32 %v15, %v28
  %v31 = vmul.f32 %v16, %v28
  %v34 = vcombine.high %v30, %v30
  %v35 = vcombine.high %v31, %v31
  %vm38 = vcmask 1043456
  %v39 = vsel %vm38, %v30, 0.0
  %v40 = vrot.slane %v39, 4
  %v41 = vadd.f32 %v39, %v40
  %v42 = vrot.slane %v41, 2
  %v43 = vadd.f32 %v41, %v42
  %v44 = vrot.slane %v43, 1
  %v45 = vadd.f32 %v43, %v44
  %v46 = vsel %vm38, %v34, 0.0
  %v47 = vrot.slane %v46, 4
  %v48 = vadd.f32 %v46, %v47
  %v49 = vrot.slane %v48, 2
  %v50 = vadd.f32 %v48, %v49
  %v51 = vrot.slane %v50, 1
  %v52 = vadd.f32 %v50, %v51
  %v53 = vsel %vm38, %v31, 0.0
  %v54 = vrot.slane %v53, 4
  %v55 = vadd.f32 %v53, %v54
  %v56 = vrot.slane %v55, 2
  %v57 = vadd.f32 %v55, %v56
  %v58 = vrot.slane %v57, 1
  %v59 = vadd.f32 %v57, %v58
  %v60 = vsel %vm38, %v35, 0.0
  %v61 = vrot.slane %v60, 4
  %v62 = vadd.f32 %v60, %v61
  %v63 = vrot.slane %v62, 2
  %v64 = vadd.f32 %v62, %v63
  %v65 = vrot.slane %v64, 1
  %v66 = vadd.f32 %v64, %v65
  %s67 = sld [smem:[#allocation2]]
  %v68 = vstv %s67
  %v69 = vadd.f32 %v45, %v68
  %v70 = vadd.f32 %v52, %v68
  %v71 = vadd.f32 %v59, %v68
  %v72 = vadd.f32 %v66, %v68
  %v77 = vcombine.low %v69, %v70
  %v79 = vunpack.c.l.s4 1983009808
  %v80 = vunpack.c.0.s8 %v79
  %v81 = vlaneseq
  %v82 = vshrl.u32 %v81, 7
  %v83 = vsub.s32 %v80, %v82
  %v84 = vrot.slane %v77, %v83
  %v85 = vcombine.low %v71, %v72
  %v87 = vunpack.c.l.s4 1983009808
  %v88 = vunpack.c.0.s8 %v87
  %v89 = vlaneseq
  %v90 = vshrl.u32 %v89, 7
  %v91 = vsub.s32 %v88, %v90
  %v92 = vrot.slane %v85, %v91
  %vm93 = vcmask 1044484
  %v94 = vsel %vm93, %v84, %v84
  %vm95 = vcmask 1046534
  %v96 = vsel %vm95, %v84, %v94
  %v97 = vrot.slane %v92, 7
  %vm98 = vcmask 1041409
  %v99 = vsel %vm98, %v97, %v96
  %vm100 = vcmask 1043459
  %v101 = vsel %vm100, %v97, %v99
  %vm102 = vcmask 1045509
  %v103 = vsel %vm102, %v97, %v101
  %vm104 = vcmask 1047559
  %v105 = vsel %vm104, %v97, %v103
  %107 = vst [vmem:[%s3] sm:$0xf] %v105
  // Predicated region
  $region14: #{spatial_attention.1} parent=0 // pred_check
    _
  $region15: #{spatial_attention.1} parent=0 // pred_check_branch
    %109 = sbr.rel (0) target = $region17
  $region16: #{spatial_attention.1} parent=0 // pred_region
    _
  $region17: #{spatial_attention.1} parent=0 // pred_fallthru
    _
  // Predicated region
  $region18: #{spatial_attention.1} parent=0 // pred_check
    _
  $region19: #{spatial_attention.1} parent=0 // pred_check_branch
    %111 = sbr.rel (0) target = $region21
  $region20: #{spatial_attention.1} parent=0 // pred_region
    _
  $region21: #{spatial_attention.1} parent=0 // pred_fallthru
    _

</llo_original>
